<compile_context>
chip_gen: v7x
topology: tpu7x:2x2x1
jax: 0.10.0
libtpu: 0.0.40
codegen_flags: <defaults>
</compile_context>

<pallas_src>
import math
from functools import partial

import jax
import jax.numpy as jnp
from jax.experimental import pallas as pl
from jax.experimental.pallas import tpu as pltpu


def _dws_conv_kernel(K, H_out, W_out,
                     x_ref, wt_ref, bdw_ref, wpw_ref, bpw_ref, o_ref):
    """One grid step: padded (Bt, C_in, Hp, Wp) slab -> (Bt, C_out, H_out*W_out).

    x_ref:   (Bt, C_in, Hp, Wp)   zero-padded input
    wt_ref:  (K*K, C_in)          depthwise taps, tap index t = dh*K + dw
    bdw_ref: (C_in, 1)            depthwise bias
    wpw_ref: (C_out, C_in)        pointwise 1x1 weights
    bpw_ref: (C_out, 1)           pointwise bias
    o_ref:   (Bt, C_out, H_out*W_out)
    """
    Bt, C_in = x_ref.shape[0], x_ref.shape[1]

    x = x_ref[...].astype(jnp.float32)
    wt = wt_ref[...].astype(jnp.float32)
    bdw = bdw_ref[...].astype(jnp.float32)
    wpw = wpw_ref[...].astype(jnp.float32)
    bpw = bpw_ref[...].astype(jnp.float32)

    # Depthwise KxK conv (stride 1): accumulate K*K shifted windows scaled by
    # their per-channel tap.
    acc = None
    for dh in range(K):
        for dw in range(K):
            tap = wt[dh * K + dw].reshape(1, C_in, 1, 1)
            window = x[:, :, dh:dh + H_out, dw:dw + W_out]
            acc = window * tap if acc is None else acc + window * tap
    acc = acc + bdw.reshape(1, C_in, 1, 1)

    # Pointwise 1x1 conv: flatten spatial to a lane-dense (C_in, H*W) slab and
    # run it through the MXU per fused batch element.
    acc = acc.reshape(Bt, C_in, H_out * W_out)
    for bi in range(Bt):
        y = jnp.dot(wpw, acc[bi], preferred_element_type=jnp.float32) + bpw
        o_ref[bi] = y.astype(o_ref.dtype)


def _pick_batch_tile(B, per_b_bytes, budget_bytes=6 * 1024 * 1024):
    """Largest divisor of B fitting the per-block VMEM budget while keeping at
    least 2 grid steps (so both v7x TensorCores get parallel work)."""
    best = 1
    for d in range(1, B + 1):
        if B % d != 0:
            continue
        if d * per_b_bytes > budget_bytes:
            continue
        if B // d < 2 and B != 1:
            continue
        best = d
    return best


def depthwise_conv2d(x, w_dw, b_dw, w_pw, b_pw, *, padding, stride=1):
    """Forward of DepthWiseConv2d.

    x:    (B, C_in, H, W)          float32
    w_dw: (C_in, 1, K, K)          depthwise weights (torch layout)
    b_dw: (C_in,)                  depthwise bias
    w_pw: (C_out, C_in, 1, 1)      pointwise weights (torch layout)
    b_pw: (C_out,)                 pointwise bias
    Returns (B, C_out, H_out, W_out).
    """
    if stride != 1:
        # TODO(synk): stride > 1 not implemented in the Pallas kernel.
        raise NotImplementedError("stride != 1 not supported")

    B, C_in, H, W = x.shape
    K = w_dw.shape[-1]
    C_out = w_pw.shape[0]
    p = padding
    Hp, Wp = H + 2 * p, W + 2 * p
    H_out, W_out = Hp - K + 1, Wp - K + 1
    HWo = H_out * W_out

    # Wrapper-side layout prep (cheap XLA ops).
    xp = jnp.pad(x, ((0, 0), (0, 0), (p, p), (p, p)))
    w_taps = jnp.transpose(w_dw.reshape(C_in, K * K), (1, 0))   # (K*K, C_in)
    b_dw2 = b_dw.reshape(C_in, 1)
    w_pw2 = w_pw.reshape(C_out, C_in)
    b_pw2 = b_pw.reshape(C_out, 1)

    # Batch-fusion tile under a VMEM budget (double-buffered in+out blocks).
    # TODO(synk): spatial (H*W) halo tiling for very large feature maps.
    per_b_bytes = 4 * (C_in * Hp * Wp + C_out * HWo)
    Bt = _pick_batch_tile(B, per_b_bytes)
    grid = (B // Bt,)

    kernel = partial(_dws_conv_kernel, K, H_out, W_out)

    flops = 2 * B * C_in * HWo * K * K + 2 * B * C_out * C_in * HWo
    bytes_accessed = 4 * (B * C_in * Hp * Wp + B * C_out * HWo
                          + K * K * C_in + C_in + C_out * C_in + C_out)

    out = pl.pallas_call(
        kernel,
        out_shape=jax.ShapeDtypeStruct((B, C_out, HWo), x.dtype),
        grid_spec=pltpu.PrefetchScalarGridSpec(
            num_scalar_prefetch=0,
            grid=grid,
            in_specs=[
                pl.BlockSpec((Bt, C_in, Hp, Wp), lambda i: (i, 0, 0, 0)),
                pl.BlockSpec((K * K, C_in), lambda i: (0, 0)),
                pl.BlockSpec((C_in, 1), lambda i: (0, 0)),
                pl.BlockSpec((C_out, C_in), lambda i: (0, 0)),
                pl.BlockSpec((C_out, 1), lambda i: (0, 0)),
            ],
            out_specs=pl.BlockSpec((Bt, C_out, HWo), lambda i: (i, 0, 0)),
        ),
        compiler_params=pltpu.CompilerParams(
            dimension_semantics=("parallel",),
            vmem_limit_bytes=32 * 1024 * 1024,
        ),
        cost_estimate=pl.CostEstimate(
            flops=flops, transcendentals=0, bytes_accessed=bytes_accessed),
    )(xp, w_taps, b_dw2, w_pw2, b_pw2)

    return out.reshape(B, C_out, H_out, W_out)


def depthwise_conv2d_ref(x, w_dw, b_dw, w_pw, b_pw, *, padding, stride=1):
    """Pure-JAX reference for the PyTorch module."""
    dn = jax.lax.conv_dimension_numbers(x.shape, w_dw.shape,
                                        ("NCHW", "OIHW", "NCHW"))
    dw = jax.lax.conv_general_dilated(
        x, w_dw, window_strides=(stride, stride),
        padding=[(padding, padding), (padding, padding)],
        dimension_numbers=dn, feature_group_count=x.shape[1])
    dw = dw + b_dw.reshape(1, -1, 1, 1)
    C_out, C_in = w_pw.shape[0], w_pw.shape[1]
    out = jnp.einsum("oc,bchw->bohw", w_pw.reshape(C_out, C_in), dw)
    return out + b_pw.reshape(1, -1, 1, 1)


if __name__ == "__main__":
    key = jax.random.PRNGKey(0)
    kx, k1, k2, k3, k4 = jax.random.split(key, 5)

    B, C_in, C_out, H, W = 2, 4, 8, 16, 16
    K, padding, stride = 3, 1, 1

    x = jax.random.normal(kx, (B, C_in, H, W), dtype=jnp.float32)
    w_dw = jax.random.normal(k1, (C_in, 1, K, K), jnp.float32) * (1.0 / K)
    b_dw = 0.1 * jax.random.normal(k2, (C_in,), jnp.float32)
    w_pw = jax.random.normal(k3, (C_out, C_in, 1, 1), jnp.float32) * (1.0 / math.sqrt(C_in))
    b_pw = 0.1 * jax.random.normal(k4, (C_out,), jnp.float32)

    out = depthwise_conv2d(x, w_dw, b_dw, w_pw, b_pw, padding=padding, stride=stride)
    out = jax.block_until_ready(out)

    ref = depthwise_conv2d_ref(x, w_dw, b_dw, w_pw, b_pw, padding=padding, stride=stride)
    assert out.shape == ref.shape == (B, C_out, H, W)
    assert jnp.allclose(out, ref, atol=1e-4, rtol=1e-4), "mismatch vs reference"

    print("KERNEL_OK")
</pallas_src>

<mosaic_0001>
module attributes {stable_mosaic.version = 11 : i64} {
  func.func @_dws_conv_kernel(%arg0: i32, %arg1: memref<1x4x18x18xf32, #tpu.memory_space<vmem>>, %arg2: memref<9x4xf32, #tpu.memory_space<vmem>>, %arg3: memref<4x1xf32, #tpu.memory_space<vmem>>, %arg4: memref<8x4xf32, #tpu.memory_space<vmem>>, %arg5: memref<8x1xf32, #tpu.memory_space<vmem>>, %arg6: memref<1x8x256xf32, #tpu.memory_space<vmem>>) attributes {dimension_semantics = [#tpu.dimension_semantics<parallel>], iteration_bounds = array<i64: 2>, scalar_prefetch = 0 : i64, scratch_operands = 0 : i64, tpu.core_type = #tpu.core_type<tc>, window_params = [{transform_indices = @transform_0, window_bounds = array<i64: 1, 4, 18, 18>}, {pipeline_mode = #tpu.pipeline_mode<synchronous>, transform_indices = @transform_1, window_bounds = array<i64: 9, 4>}, {pipeline_mode = #tpu.pipeline_mode<synchronous>, transform_indices = @transform_2, window_bounds = array<i64: 4, 1>}, {pipeline_mode = #tpu.pipeline_mode<synchronous>, transform_indices = @transform_3, window_bounds = array<i64: 8, 4>}, {pipeline_mode = #tpu.pipeline_mode<synchronous>, transform_indices = @transform_4, window_bounds = array<i64: 8, 1>}, {transform_indices = @transform_5, window_bounds = array<i64: 1, 8, 256>}]} {
    %c0 = arith.constant 0 : index
    %c0_0 = arith.constant 0 : index
    %c0_1 = arith.constant 0 : index
    %c0_2 = arith.constant 0 : index
    %0 = vector.load %arg1[%c0, %c0_0, %c0_1, %c0_2] : memref<1x4x18x18xf32, #tpu.memory_space<vmem>>, vector<1x4x18x18xf32>
    %c0_3 = arith.constant 0 : index
    %c0_4 = arith.constant 0 : index
    %1 = vector.load %arg2[%c0_3, %c0_4] : memref<9x4xf32, #tpu.memory_space<vmem>>, vector<9x4xf32>
    %c0_5 = arith.constant 0 : index
    %c0_6 = arith.constant 0 : index
    %2 = vector.load %arg3[%c0_5, %c0_6] : memref<4x1xf32, #tpu.memory_space<vmem>>, vector<4x1xf32>
    %c0_7 = arith.constant 0 : index
    %c0_8 = arith.constant 0 : index
    %3 = vector.load %arg4[%c0_7, %c0_8] : memref<8x4xf32, #tpu.memory_space<vmem>>, vector<8x4xf32>
    %c0_9 = arith.constant 0 : index
    %c0_10 = arith.constant 0 : index
    %4 = vector.load %arg5[%c0_9, %c0_10] : memref<8x1xf32, #tpu.memory_space<vmem>>, vector<8x1xf32>
    %5 = vector.extract_strided_slice %1 {offsets = [0, 0], sizes = [1, 4], strides = [1, 1]} : vector<9x4xf32> to vector<1x4xf32>
    %6 = vector.shape_cast %5 : vector<1x4xf32> to vector<4xf32>
    %7 = vector.shape_cast %6 : vector<4xf32> to vector<1x4x1x1xf32>
    %8 = vector.extract_strided_slice %0 {offsets = [0, 0, 0, 0], sizes = [1, 4, 16, 16], strides = [1, 1, 1, 1]} : vector<1x4x18x18xf32> to vector<1x4x16x16xf32>
    %9 = vector.broadcast %7 : vector<1x4x1x1xf32> to vector<1x4x16x16xf32>
    %10 = arith.mulf %8, %9 : vector<1x4x16x16xf32>
    %11 = vector.extract_strided_slice %1 {offsets = [1, 0], sizes = [1, 4], strides = [1, 1]} : vector<9x4xf32> to vector<1x4xf32>
    %12 = vector.shape_cast %11 : vector<1x4xf32> to vector<4xf32>
    %13 = vector.shape_cast %12 : vector<4xf32> to vector<1x4x1x1xf32>
    %14 = vector.extract_strided_slice %0 {offsets = [0, 0, 0, 1], sizes = [1, 4, 16, 16], strides = [1, 1, 1, 1]} : vector<1x4x18x18xf32> to vector<1x4x16x16xf32>
    %15 = vector.broadcast %13 : vector<1x4x1x1xf32> to vector<1x4x16x16xf32>
    %16 = arith.mulf %14, %15 : vector<1x4x16x16xf32>
    %17 = arith.addf %10, %16 : vector<1x4x16x16xf32>
    %18 = vector.extract_strided_slice %1 {offsets = [2, 0], sizes = [1, 4], strides = [1, 1]} : vector<9x4xf32> to vector<1x4xf32>
    %19 = vector.shape_cast %18 : vector<1x4xf32> to vector<4xf32>
    %20 = vector.shape_cast %19 : vector<4xf32> to vector<1x4x1x1xf32>
    %21 = vector.extract_strided_slice %0 {offsets = [0, 0, 0, 2], sizes = [1, 4, 16, 16], strides = [1, 1, 1, 1]} : vector<1x4x18x18xf32> to vector<1x4x16x16xf32>
    %22 = vector.broadcast %20 : vector<1x4x1x1xf32> to vector<1x4x16x16xf32>
    %23 = arith.mulf %21, %22 : vector<1x4x16x16xf32>
    %24 = arith.addf %17, %23 : vector<1x4x16x16xf32>
    %25 = vector.extract_strided_slice %1 {offsets = [3, 0], sizes = [1, 4], strides = [1, 1]} : vector<9x4xf32> to vector<1x4xf32>
    %26 = vector.shape_cast %25 : vector<1x4xf32> to vector<4xf32>
    %27 = vector.shape_cast %26 : vector<4xf32> to vector<1x4x1x1xf32>
    %28 = vector.extract_strided_slice %0 {offsets = [0, 0, 1, 0], sizes = [1, 4, 16, 16], strides = [1, 1, 1, 1]} : vector<1x4x18x18xf32> to vector<1x4x16x16xf32>
    %29 = vector.broadcast %27 : vector<1x4x1x1xf32> to vector<1x4x16x16xf32>
    %30 = arith.mulf %28, %29 : vector<1x4x16x16xf32>
    %31 = arith.addf %24, %30 : vector<1x4x16x16xf32>
    %32 = vector.extract_strided_slice %1 {offsets = [4, 0], sizes = [1, 4], strides = [1, 1]} : vector<9x4xf32> to vector<1x4xf32>
    %33 = vector.shape_cast %32 : vector<1x4xf32> to vector<4xf32>
    %34 = vector.shape_cast %33 : vector<4xf32> to vector<1x4x1x1xf32>
    %35 = vector.extract_strided_slice %0 {offsets = [0, 0, 1, 1], sizes = [1, 4, 16, 16], strides = [1, 1, 1, 1]} : vector<1x4x18x18xf32> to vector<1x4x16x16xf32>
    %36 = vector.broadcast %34 : vector<1x4x1x1xf32> to vector<1x4x16x16xf32>
    %37 = arith.mulf %35, %36 : vector<1x4x16x16xf32>
    %38 = arith.addf %31, %37 : vector<1x4x16x16xf32>
    %39 = vector.extract_strided_slice %1 {offsets = [5, 0], sizes = [1, 4], strides = [1, 1]} : vector<9x4xf32> to vector<1x4xf32>
    %40 = vector.shape_cast %39 : vector<1x4xf32> to vector<4xf32>
    %41 = vector.shape_cast %40 : vector<4xf32> to vector<1x4x1x1xf32>
    %42 = vector.extract_strided_slice %0 {offsets = [0, 0, 1, 2], sizes = [1, 4, 16, 16], strides = [1, 1, 1, 1]} : vector<1x4x18x18xf32> to vector<1x4x16x16xf32>
    %43 = vector.broadcast %41 : vector<1x4x1x1xf32> to vector<1x4x16x16xf32>
    %44 = arith.mulf %42, %43 : vector<1x4x16x16xf32>
    %45 = arith.addf %38, %44 : vector<1x4x16x16xf32>
    %46 = vector.extract_strided_slice %1 {offsets = [6, 0], sizes = [1, 4], strides = [1, 1]} : vector<9x4xf32> to vector<1x4xf32>
    %47 = vector.shape_cast %46 : vector<1x4xf32> to vector<4xf32>
    %48 = vector.shape_cast %47 : vector<4xf32> to vector<1x4x1x1xf32>
    %49 = vector.extract_strided_slice %0 {offsets = [0, 0, 2, 0], sizes = [1, 4, 16, 16], strides = [1, 1, 1, 1]} : vector<1x4x18x18xf32> to vector<1x4x16x16xf32>
    %50 = vector.broadcast %48 : vector<1x4x1x1xf32> to vector<1x4x16x16xf32>
    %51 = arith.mulf %49, %50 : vector<1x4x16x16xf32>
    %52 = arith.addf %45, %51 : vector<1x4x16x16xf32>
    %53 = vector.extract_strided_slice %1 {offsets = [7, 0], sizes = [1, 4], strides = [1, 1]} : vector<9x4xf32> to vector<1x4xf32>
    %54 = vector.shape_cast %53 : vector<1x4xf32> to vector<4xf32>
    %55 = vector.shape_cast %54 : vector<4xf32> to vector<1x4x1x1xf32>
    %56 = vector.extract_strided_slice %0 {offsets = [0, 0, 2, 1], sizes = [1, 4, 16, 16], strides = [1, 1, 1, 1]} : vector<1x4x18x18xf32> to vector<1x4x16x16xf32>
    %57 = vector.broadcast %55 : vector<1x4x1x1xf32> to vector<1x4x16x16xf32>
    %58 = arith.mulf %56, %57 : vector<1x4x16x16xf32>
    %59 = arith.addf %52, %58 : vector<1x4x16x16xf32>
    %60 = vector.extract_strided_slice %1 {offsets = [8, 0], sizes = [1, 4], strides = [1, 1]} : vector<9x4xf32> to vector<1x4xf32>
    %61 = vector.shape_cast %60 : vector<1x4xf32> to vector<4xf32>
    %62 = vector.shape_cast %61 : vector<4xf32> to vector<1x4x1x1xf32>
    %63 = vector.extract_strided_slice %0 {offsets = [0, 0, 2, 2], sizes = [1, 4, 16, 16], strides = [1, 1, 1, 1]} : vector<1x4x18x18xf32> to vector<1x4x16x16xf32>
    %64 = vector.broadcast %62 : vector<1x4x1x1xf32> to vector<1x4x16x16xf32>
    %65 = arith.mulf %63, %64 : vector<1x4x16x16xf32>
    %66 = arith.addf %59, %65 : vector<1x4x16x16xf32>
    %67 = vector.shape_cast %2 : vector<4x1xf32> to vector<1x4x1x1xf32>
    %68 = vector.broadcast %67 : vector<1x4x1x1xf32> to vector<1x4x16x16xf32>
    %69 = arith.addf %66, %68 : vector<1x4x16x16xf32>
    %70 = vector.shape_cast %69 : vector<1x4x16x16xf32> to vector<1x4x256xf32>
    %71 = vector.shape_cast %70 : vector<1x4x256xf32> to vector<4x256xf32>
    %cst = arith.constant dense<0.000000e+00> : vector<8x256xf32>
    %72 = tpu.matmul %3, %71, %cst {dimension_numbers = #tpu.dot_dimension_numbers<[1], [0], [0], [1], [0, 0, 1, 1], [], []>} : vector<8x4xf32>, vector<4x256xf32>, vector<8x256xf32> -> vector<8x256xf32>
    %73 = vector.broadcast %4 : vector<8x1xf32> to vector<8x256xf32>
    %74 = arith.addf %72, %73 : vector<8x256xf32>
    %c0_11 = arith.constant 0 : index
    %c0_12 = arith.constant 0 : index
    %c0_13 = arith.constant 0 : index
    %75 = vector.load %arg6[%c0_11, %c0_12, %c0_13] : memref<1x8x256xf32, #tpu.memory_space<vmem>>, vector<1x8x256xf32>
    %76 = vector.shape_cast %75 : vector<1x8x256xf32> to vector<8x256xf32>
    %77 = vector.shape_cast %74 : vector<8x256xf32> to vector<1x8x256xf32>
    tpu.vector_store %arg6[%c0_11, %c0_12, %c0_13], %77 {strides = array<i32>} : memref<1x8x256xf32, #tpu.memory_space<vmem>>, vector<1x8x256xf32>,
    return
  }
  func.func @transform_0(%arg0: i32) -> (i32, i32, i32, i32) {
    %c0_i32 = arith.constant 0 : i32
    %c0_i32_0 = arith.constant 0 : i32
    %c0_i32_1 = arith.constant 0 : i32
    %c0_i32_2 = arith.constant 0 : i32
    return %arg0, %c0_i32, %c0_i32_0, %c0_i32_1 : i32, i32, i32, i32
  }
  func.func @transform_1(%arg0: i32) -> (i32, i32) {
    %c0_i32 = arith.constant 0 : i32
    %c0_i32_0 = arith.constant 0 : i32
    %c0_i32_1 = arith.constant 0 : i32
    return %c0_i32, %c0_i32_0 : i32, i32
  }
  func.func @transform_2(%arg0: i32) -> (i32, i32) {
    %c0_i32 = arith.constant 0 : i32
    %c0_i32_0 = arith.constant 0 : i32
    %c0_i32_1 = arith.constant 0 : i32
    return %c0_i32, %c0_i32_0 : i32, i32
  }
  func.func @transform_3(%arg0: i32) -> (i32, i32) {
    %c0_i32 = arith.constant 0 : i32
    %c0_i32_0 = arith.constant 0 : i32
    %c0_i32_1 = arith.constant 0 : i32
    return %c0_i32, %c0_i32_0 : i32, i32
  }
  func.func @transform_4(%arg0: i32) -> (i32, i32) {
    %c0_i32 = arith.constant 0 : i32
    %c0_i32_0 = arith.constant 0 : i32
    %c0_i32_1 = arith.constant 0 : i32
    return %c0_i32, %c0_i32_0 : i32, i32
  }
  func.func @transform_5(%arg0: i32) -> (i32, i32, i32) {
    %c0_i32 = arith.constant 0 : i32
    %c0_i32_0 = arith.constant 0 : i32
    %c0_i32_1 = arith.constant 0 : i32
    return %arg0, %c0_i32, %c0_i32_0 : i32, i32, i32
  }
}

</mosaic_0001>

<llo_original>
// kernel: tpu_custom_call.1
$region0: #{tpu_custom_call.1}
  #allocation0 [shape = 'u32[]', space=smem, size = 0x4, offset = 0x4, fixed_abs, tag = 'smem constant byte address 0x4 - core index']
  #allocation1 [shape = 'u32[144,128]{1,0:T(1,128)}', space=vmem, size = 0x12000, scoped, tag = 'internal scratch']
  %s0 = inlined_call_operand.vmem [shape: f32[2,4,18,18], index: 0, kind: input, shape index: {}]
  %s1 = inlined_call_operand.vmem [shape: f32[9,4], index: 1, kind: input, shape index: {}]
  %s2 = inlined_call_operand.vmem [shape: f32[4,1], index: 2, kind: input, shape index: {}]
  %s3 = inlined_call_operand.vmem [shape: f32[8,4], index: 3, kind: input, shape index: {}]
  %s4 = inlined_call_operand.vmem [shape: f32[8,1], index: 4, kind: input, shape index: {}]
  %s5 = inlined_call_operand.hbm [shape: f32[2,8,256], index: 5, kind: output, shape index: {}]
  %s6 = sld [smem:[#allocation0]]
  $region53: #{tpu_custom_call.1} parent=0
    _
  %s8 = ssub.s32 1, %s6
  %s9 = scalar_select 0, %s8, %s6
  $region1: #{tpu_custom_call.1} parent=0
    #allocation2 [shape = 'u8[16384]{0}', space=vmem, size = 0x4000, scoped, tag = 'output window, operand 0']
    #allocation3 [shape = 's32[2]{0}', space=sflag, size = 0x8, scoped, tag = 'scoped memory for tpu_custom_call.1']
    %10 = vsyncpa [#allocation3], 0
    %s11 = scalar_lea.sflag [#allocation3], 1
    %12 = vsyncpa %s11, 0
    loop: start=0, step=1, limit=4
    $region2: #{tpu_custom_call.1} parent=1 // loop_pre_header
      _
    $region3: #{tpu_custom_call.1} parent=1 // loop_header
      %s14 = sphi 0, %s18
      %p15 = scmp.ge.s32.totalorder %s14, 4
      %s24 = sphi 0, %s26
      %s27 = sphi 0, %s24
      %s28 = sphi 0, %s27
      %s44 = sphi 0, %s28
      %s48 = sphi 0, %s48
      %s50 = sphi 0, %s48
      %s51 = sphi 0, %s50
      %s65 = sphi 0, %s51
      %s69 = sphi 0, %s69
      %s71 = sphi 0, %s69
      %s72 = sphi 0, %s71
      %s86 = sphi 0, %s72
      %s90 = sphi 0, %s90
      %s92 = sphi 0, %s90
      %s93 = sphi 0, %s92
      %s107 = sphi 0, %s93
      %s111 = sphi 0, %s111
      %s113 = sphi 0, %s111
      %s114 = sphi 0, %s113
      %s128 = sphi 0, %s114
      %s134 = sphi 0, %s136
      %s137 = sphi 0, %s134
      %s138 = sphi 0, %s137
      %s154 = sphi 0, %s138
    $region4: #{tpu_custom_call.1} parent=1 // loop_header_branch
      %17 = sbr.rel (%p15) target = $region8
    $region5: #{tpu_custom_call.1} parent=1 // loop_body
      %s19 = ssub.s32 %s14, 1
      %s20 = ssub.s32 %s14, 2
      %s21 = sadd.s32 %s14, 1
      %s22 = ssub.s32 %s14, %s21
      %p23 = scmp.eq.s32.totalorder %s22, 0
      %s25 = sadd.s32 %s24, 1
      %s26 = scalar_select %p23, %s24, %s25
      %p29 = pneg %p23
      %p30 = scmp.eq.s32.totalorder %s14, 1
      %p31 = por %p29, %p30
      %p32 = scmp.ne.s32.totalorder %s24, %s27
      %p33 = scmp.eq.s32.totalorder %s14, 0
      %p34 = por %p32, %p33
      %p35 = scmp.ne.s32.totalorder %s24, %s27
      %p36 = scmp.eq.s32.totalorder %s19, 1
      %p37 = por %p35, %p36
      %p38 = scmp.ne.s32.totalorder %s27, %s28
      %p39 = scmp.eq.s32.totalorder %s19, 0
      %p40 = por %p38, %p39
      %p41 = scmp.ne.s32.totalorder %s27, %s28
      %p42 = scmp.eq.s32.totalorder %s20, 1
      %p43 = por %p41, %p42
      %p45 = scmp.ne.s32.totalorder %s28, %s44
      %p46 = scmp.eq.s32.totalorder %s20, 0
      %p47 = por %p45, %p46
      %s49 = sadd.s32 %s48, 1
      %p52 = scmp.eq.s32.totalorder %s14, 1
      %p53 = scmp.ne.s32.totalorder %s48, %s50
      %p54 = scmp.eq.s32.totalorder %s14, 0
      %p55 = por %p53, %p54
      %p56 = scmp.ne.s32.totalorder %s48, %s50
      %p57 = scmp.eq.s32.totalorder %s19, 1
      %p58 = por %p56, %p57
      %p59 = scmp.ne.s32.totalorder %s50, %s51
      %p60 = scmp.eq.s32.totalorder %s19, 0
      %p61 = por %p59, %p60
      %p62 = scmp.ne.s32.totalorder %s50, %s51
      %p63 = scmp.eq.s32.totalorder %s20, 1
      %p64 = por %p62, %p63
      %p66 = scmp.ne.s32.totalorder %s51, %s65
      %p67 = scmp.eq.s32.totalorder %s20, 0
      %p68 = por %p66, %p67
      %s70 = sadd.s32 %s69, 1
      %p73 = scmp.eq.s32.totalorder %s14, 1
      %p74 = scmp.ne.s32.totalorder %s69, %s71
      %p75 = scmp.eq.s32.totalorder %s14, 0
      %p76 = por %p74, %p75
      %p77 = scmp.ne.s32.totalorder %s69, %s71
      %p78 = scmp.eq.s32.totalorder %s19, 1
      %p79 = por %p77, %p78
      %p80 = scmp.ne.s32.totalorder %s71, %s72
      %p81 = scmp.eq.s32.totalorder %s19, 0
      %p82 = por %p80, %p81
      %p83 = scmp.ne.s32.totalorder %s71, %s72
      %p84 = scmp.eq.s32.totalorder %s20, 1
      %p85 = por %p83, %p84
      %p87 = scmp.ne.s32.totalorder %s72, %s86
      %p88 = scmp.eq.s32.totalorder %s20, 0
      %p89 = por %p87, %p88
      %s91 = sadd.s32 %s90, 1
      %p94 = scmp.eq.s32.totalorder %s14, 1
      %p95 = scmp.ne.s32.totalorder %s90, %s92
      %p96 = scmp.eq.s32.totalorder %s14, 0
      %p97 = por %p95, %p96
      %p98 = scmp.ne.s32.totalorder %s90, %s92
      %p99 = scmp.eq.s32.totalorder %s19, 1
      %p100 = por %p98, %p99
      %p101 = scmp.ne.s32.totalorder %s92, %s93
      %p102 = scmp.eq.s32.totalorder %s19, 0
      %p103 = por %p101, %p102
      %p104 = scmp.ne.s32.totalorder %s92, %s93
      %p105 = scmp.eq.s32.totalorder %s20, 1
      %p106 = por %p104, %p105
      %p108 = scmp.ne.s32.totalorder %s93, %s107
      %p109 = scmp.eq.s32.totalorder %s20, 0
      %p110 = por %p108, %p109
      %s112 = sadd.s32 %s111, 1
      %p115 = scmp.eq.s32.totalorder %s14, 1
      %p116 = scmp.ne.s32.totalorder %s111, %s113
      %p117 = scmp.eq.s32.totalorder %s14, 0
      %p118 = por %p116, %p117
      %p119 = scmp.ne.s32.totalorder %s111, %s113
      %p120 = scmp.eq.s32.totalorder %s19, 1
      %p121 = por %p119, %p120
      %p122 = scmp.ne.s32.totalorder %s113, %s114
      %p123 = scmp.eq.s32.totalorder %s19, 0
      %p124 = por %p122, %p123
      %p125 = scmp.ne.s32.totalorder %s113, %s114
      %p126 = scmp.eq.s32.totalorder %s20, 1
      %p127 = por %p125, %p126
      %p129 = scmp.ne.s32.totalorder %s114, %s128
      %p130 = scmp.eq.s32.totalorder %s20, 0
      %p131 = por %p129, %p130
      %s132 = ssub.s32 %s14, %s21
      %p133 = scmp.eq.s32.totalorder %s132, 0
      %s135 = sadd.s32 %s134, 1
      %s136 = scalar_select %p133, %s134, %s135
      %p139 = pneg %p133
      %p140 = scmp.eq.s32.totalorder %s14, 1
      %p141 = por %p139, %p140
      %p142 = scmp.ne.s32.totalorder %s134, %s137
      %p143 = scmp.eq.s32.totalorder %s14, 0
      %p144 = por %p142, %p143
      %p145 = scmp.ne.s32.totalorder %s134, %s137
      %p146 = scmp.eq.s32.totalorder %s19, 1
      %p147 = por %p145, %p146
      %p148 = scmp.ne.s32.totalorder %s137, %s138
      %p149 = scmp.eq.s32.totalorder %s19, 0
      %p150 = por %p148, %p149
      %p151 = scmp.ne.s32.totalorder %s137, %s138
      %p152 = scmp.eq.s32.totalorder %s20, 1
      %p153 = por %p151, %p152
      %p155 = scmp.ne.s32.totalorder %s138, %s154
      %p156 = scmp.eq.s32.totalorder %s20, 0
      %p157 = por %p155, %p156
      %p158 = scmp.le.s32.totalorder 1, %s14
      %p159 = scmp.lt.s32.totalorder %s14, 3
      %p160 = pnand %p158, %p159
      %p161 = pneg %p160
      // Predicated region
      $region9: #{tpu_custom_call.1} parent=5 // pred_check
        _
      $region10: #{tpu_custom_call.1} parent=5 // pred_check_branch
        %163 = sbr.rel (%p160) target = $region12
      $region11: #{tpu_custom_call.1} parent=5 // pred_region
        %s164 = ssub.s32 %s14, 1
        // Predicated region
        $region13: #{tpu_custom_call.1} parent=11 // pred_check
          %p165 = pneg %p61
        $region14: #{tpu_custom_call.1} parent=11 // pred_check_branch
          %167 = sbr.rel (%p165) target = $region16
        $region15: #{tpu_custom_call.1} parent=11 // pred_region
          _
        $region16: #{tpu_custom_call.1} parent=11 // pred_fallthru
          _
        // Predicated region
        $region17: #{tpu_custom_call.1} parent=11 // pred_check
          %p168 = pneg %p82
        $region18: #{tpu_custom_call.1} parent=11 // pred_check_branch
          %170 = sbr.rel (%p168) target = $region20
        $region19: #{tpu_custom_call.1} parent=11 // pred_region
          _
        $region20: #{tpu_custom_call.1} parent=11 // pred_fallthru
          _
        // Predicated region
        $region21: #{tpu_custom_call.1} parent=11 // pred_check
          %p171 = pneg %p103
        $region22: #{tpu_custom_call.1} parent=11 // pred_check_branch
          %173 = sbr.rel (%p171) target = $region24
        $region23: #{tpu_custom_call.1} parent=11 // pred_region
          _
        $region24: #{tpu_custom_call.1} parent=11 // pred_fallthru
          _
        // Predicated region
        $region25: #{tpu_custom_call.1} parent=11 // pred_check
          %p174 = pneg %p124
        $region26: #{tpu_custom_call.1} parent=11 // pred_check_branch
          %176 = sbr.rel (%p174) target = $region28
        $region27: #{tpu_custom_call.1} parent=11 // pred_region
          _
        $region28: #{tpu_custom_call.1} parent=11 // pred_fallthru
          _
      $region12: #{tpu_custom_call.1} parent=5 // pred_fallthru
        _
      %p177 = scmp.lt.s32.totalorder %s14, 2
      // Predicated region
      $region29: #{tpu_custom_call.1} parent=5 // pred_check
        %p178 = pneg %p177
      $region30: #{tpu_custom_call.1} parent=5 // pred_check_branch
        %180 = sbr.rel (%p178) target = $region32
      $region31: #{tpu_custom_call.1} parent=5 // pred_region
        // Predicated region
        $region33: #{tpu_custom_call.1} parent=31 // pred_check
          %p181 = pneg %p34
        $region34: #{tpu_custom_call.1} parent=31 // pred_check_branch
          %183 = sbr.rel (%p181) target = $region36
        $region35: #{tpu_custom_call.1} parent=31 // pred_region
          %p184 = scmp.lt.s32.totalorder %s14, 1
          %s185 = scalar_select %p184, %s14, 1
          %s186 = smul.addr %s185, 12
          %s187 = smul.addr %s186, 8
          %s188 = scalar_lea.vmem %s0, %s187
        $region36: #{tpu_custom_call.1} parent=31 // pred_fallthru
          _
      $region32: #{tpu_custom_call.1} parent=5 // pred_fallthru
        _
      %p189 = scmp.le.s32.totalorder 1, %s14
      %p190 = scmp.lt.s32.totalorder %s14, 3
      %p191 = pnand %p189, %p190
      %p192 = pneg %p191
      // Predicated region
      $region37: #{tpu_custom_call.1} parent=5 // pred_check
        _
      $region38: #{tpu_custom_call.1} parent=5 // pred_check_branch
        %194 = sbr.rel (%p191) target = $region40
      $region39: #{tpu_custom_call.1} parent=5 // pred_region
        %s195 = ssub.s32 %s14, 1
        %p196 = scmp.lt.s32.totalorder %s19, 1
        %s197 = scalar_select %p196, %s19, 1
        %s198 = smul.addr %s197, 12
        %s199 = smul.addr %s198, 8
        %s200 = scalar_lea.vmem %s0, %s199
        %p201 = pneg %p40
        %p202 = pneg %p37
        %p203 = pneg %p61
        %p204 = pneg %p58
        %p205 = pneg %p82
        %p206 = pneg %p79
        %p207 = pneg %p103
        %p208 = pneg %p100
        %p209 = pneg %p124
        %p210 = pneg %p121
        %p211 = pneg %p150
        %p212 = pneg %p147
        %s213 = sand.u32 %s137, 1
        %s214 = scalar_lea.sflag [#allocation3], %s213
        %s215 = sand.u32 %s137, 1
        %s216 = smul.addr %s215, 16
        %s217 = scalar_lea.vmem [#allocation2], %s216
        %p218 = scmp.lt.s32.totalorder %s19, 1
        %s219 = scalar_select %p218, %s19, 1
        %s220 = smul.addr %s219, 12
        %s221 = smul.addr %s220, 8
        %s222 = scalar_lea.vmem %s0, %s221
        %v223 = vld [vmem:[%s222] sm:$0xff]
        %v224 = vld [vmem:[%s222 + $0x8] sm:$0xff]
        %v225 = vld [vmem:[%s222 + $0x10] sm:$0x3]
        %v226 = vld [vmem:[%s222 + $0x18] sm:$0xff]
        %v227 = vld [vmem:[%s222 + $0x20] sm:$0xff]
        %v228 = vld [vmem:[%s222 + $0x28] sm:$0x3]
        %v229 = vld [vmem:[%s222 + $0x30] sm:$0xff]
        %v230 = vld [vmem:[%s222 + $0x38] sm:$0xff]
        %v231 = vld [vmem:[%s222 + $0x40] sm:$0x3]
        %v232 = vld [vmem:[%s222 + $0x48] sm:$0xff]
        %v233 = vld [vmem:[%s222 + $0x50] sm:$0xff]
        %v234 = vld [vmem:[%s222 + $0x58] sm:$0x3]
        %v235 = vld [vmem:[%s1] sm:$0xff]
        %v236 = vld [vmem:[%s1 + $0x8] sm:$0x1]
        %v237 = vld [vmem:[%s2] sm:$0xf]
        %v238 = vld [vmem:[%s3] sm:$0xff]
        %v239 = vld [vmem:[%s4] sm:$0xff]
        %v240 = vlaneseq
        %v241 = vshrl.u32 %v240, 7
        %v242 = vsub.s32 0, %v241
        %v243 = vrot.slane %v235, %v242
        %245 = vbcast.lane.b32.xlu0 %v243, 256
        %v246 = vpop.permute.xlu0 %245
        %v247 = vlaneseq
        %v248 = vshrl.u32 %v247, 7
        %v249 = vsub.s32 0, %v248
        %v250 = vrot.slane %v246, %v249
        %v251 = vlaneseq
        %v252 = vshrl.u32 %v251, 7
        %v253 = vsub.s32 1, %v252
        %v254 = vrot.slane %v246, %v253
        %v255 = vlaneseq
        %v256 = vshrl.u32 %v255, 7
        %v257 = vsub.s32 2, %v256
        %v258 = vrot.slane %v246, %v257
        %v259 = vlaneseq
        %v260 = vshrl.u32 %v259, 7
        %v261 = vsub.s32 3, %v260
        %v262 = vrot.slane %v246, %v261
        %v263 = vmul.f32 %v223, %v250
        %v264 = vmul.f32 %v224, %v250
        %v265 = vmul.f32 %v226, %v254
        %v266 = vmul.f32 %v227, %v254
        %v267 = vmul.f32 %v229, %v258
        %v268 = vmul.f32 %v230, %v258
        %v269 = vmul.f32 %v232, %v262
        %v270 = vmul.f32 %v233, %v262
        %v271 = vlaneseq
        %v272 = vshrl.u32 %v271, 7
        %v273 = vsub.s32 1, %v272
        %v274 = vrot.slane %v235, %v273
        %276 = vbcast.lane.b32.xlu0 %v274, 256
        %v277 = vpop.permute.xlu0 %276
        %v278 = vlaneseq
        %v279 = vshrl.u32 %v278, 7
        %v280 = vsub.s32 0, %v279
        %v281 = vrot.slane %v277, %v280
        %v282 = vlaneseq
        %v283 = vshrl.u32 %v282, 7
        %v284 = vsub.s32 1, %v283
        %v285 = vrot.slane %v277, %v284
        %v286 = vlaneseq
        %v287 = vshrl.u32 %v286, 7
        %v288 = vsub.s32 2, %v287
        %v289 = vrot.slane %v277, %v288
        %v290 = vlaneseq
        %v291 = vshrl.u32 %v290, 7
        %v292 = vsub.s32 3, %v291
        %v293 = vrot.slane %v277, %v292
        %v294 = vmul.f32 %v223, %v281
        %v295 = vmul.f32 %v224, %v281
        %v296 = vmul.f32 %v226, %v285
        %v297 = vmul.f32 %v227, %v285
        %v298 = vmul.f32 %v229, %v289
        %v299 = vmul.f32 %v230, %v289
        %v300 = vmul.f32 %v232, %v293
        %v301 = vmul.f32 %v233, %v293
        %310 = vrot.lane.b32.xlu0 %v294, 127
        %v311 = vpop.permute.xlu0 %310
        %312 = vrot.lane.b32.xlu0 %v295, 127
        %v313 = vpop.permute.xlu0 %312
        %314 = vrot.lane.b32.xlu0 %v296, 127
        %v315 = vpop.permute.xlu0 %314
        %316 = vrot.lane.b32.xlu0 %v297, 127
        %v317 = vpop.permute.xlu0 %316
        %318 = vrot.lane.b32.xlu0 %v298, 127
        %v319 = vpop.permute.xlu0 %318
        %320 = vrot.lane.b32.xlu0 %v299, 127
        %v321 = vpop.permute.xlu0 %320
        %322 = vrot.lane.b32.xlu0 %v300, 127
        %v323 = vpop.permute.xlu0 %322
        %324 = vrot.lane.b32.xlu0 %v301, 127
        %v325 = vpop.permute.xlu0 %324
        %v334 = vadd.f32 %v263, %v311
        %v335 = vadd.f32 %v264, %v313
        %v336 = vadd.f32 %v265, %v315
        %v337 = vadd.f32 %v266, %v317
        %v338 = vadd.f32 %v267, %v319
        %v339 = vadd.f32 %v268, %v321
        %v340 = vadd.f32 %v269, %v323
        %v341 = vadd.f32 %v270, %v325
        %v342 = vlaneseq
        %v343 = vshrl.u32 %v342, 7
        %v344 = vsub.s32 2, %v343
        %v345 = vrot.slane %v235, %v344
        %347 = vbcast.lane.b32.xlu0 %v345, 256
        %v348 = vpop.permute.xlu0 %347
        %v349 = vlaneseq
        %v350 = vshrl.u32 %v349, 7
        %v351 = vsub.s32 0, %v350
        %v352 = vrot.slane %v348, %v351
        %v353 = vlaneseq
        %v354 = vshrl.u32 %v353, 7
        %v355 = vsub.s32 1, %v354
        %v356 = vrot.slane %v348, %v355
        %v357 = vlaneseq
        %v358 = vshrl.u32 %v357, 7
        %v359 = vsub.s32 2, %v358
        %v360 = vrot.slane %v348, %v359
        %v361 = vlaneseq
        %v362 = vshrl.u32 %v361, 7
        %v363 = vsub.s32 3, %v362
        %v364 = vrot.slane %v348, %v363
        %v365 = vmul.f32 %v223, %v352
        %v366 = vmul.f32 %v224, %v352
        %v367 = vmul.f32 %v226, %v356
        %v368 = vmul.f32 %v227, %v356
        %v369 = vmul.f32 %v229, %v360
        %v370 = vmul.f32 %v230, %v360
        %v371 = vmul.f32 %v232, %v364
        %v372 = vmul.f32 %v233, %v364
        %381 = vrot.lane.b32.xlu0 %v365, 126
        %v382 = vpop.permute.xlu0 %381
        %383 = vrot.lane.b32.xlu0 %v366, 126
        %v384 = vpop.permute.xlu0 %383
        %385 = vrot.lane.b32.xlu0 %v367, 126
        %v386 = vpop.permute.xlu0 %385
        %387 = vrot.lane.b32.xlu0 %v368, 126
        %v388 = vpop.permute.xlu0 %387
        %389 = vrot.lane.b32.xlu0 %v369, 126
        %v390 = vpop.permute.xlu0 %389
        %391 = vrot.lane.b32.xlu0 %v370, 126
        %v392 = vpop.permute.xlu0 %391
        %393 = vrot.lane.b32.xlu0 %v371, 126
        %v394 = vpop.permute.xlu0 %393
        %395 = vrot.lane.b32.xlu0 %v372, 126
        %v396 = vpop.permute.xlu0 %395
        %v405 = vadd.f32 %v334, %v382
        %v406 = vadd.f32 %v335, %v384
        %v407 = vadd.f32 %v336, %v386
        %v408 = vadd.f32 %v337, %v388
        %v409 = vadd.f32 %v338, %v390
        %v410 = vadd.f32 %v339, %v392
        %v411 = vadd.f32 %v340, %v394
        %v412 = vadd.f32 %v341, %v396
        %v413 = vlaneseq
        %v414 = vshrl.u32 %v413, 7
        %v415 = vsub.s32 3, %v414
        %v416 = vrot.slane %v235, %v415
        %418 = vbcast.lane.b32.xlu0 %v416, 256
        %v419 = vpop.permute.xlu0 %418
        %v420 = vlaneseq
        %v421 = vshrl.u32 %v420, 7
        %v422 = vsub.s32 0, %v421
        %v423 = vrot.slane %v419, %v422
        %v424 = vlaneseq
        %v425 = vshrl.u32 %v424, 7
        %v426 = vsub.s32 1, %v425
        %v427 = vrot.slane %v419, %v426
        %v428 = vlaneseq
        %v429 = vshrl.u32 %v428, 7
        %v430 = vsub.s32 2, %v429
        %v431 = vrot.slane %v419, %v430
        %v432 = vlaneseq
        %v433 = vshrl.u32 %v432, 7
        %v434 = vsub.s32 3, %v433
        %v435 = vrot.slane %v419, %v434
        %v436 = vmul.f32 %v223, %v423
        %v437 = vmul.f32 %v224, %v423
        %v438 = vmul.f32 %v225, %v423
        %v439 = vmul.f32 %v226, %v427
        %v440 = vmul.f32 %v227, %v427
        %v441 = vmul.f32 %v228, %v427
        %v442 = vmul.f32 %v229, %v431
        %v443 = vmul.f32 %v230, %v431
        %v444 = vmul.f32 %v231, %v431
        %v445 = vmul.f32 %v232, %v435
        %v446 = vmul.f32 %v233, %v435
        %v447 = vmul.f32 %v234, %v435
        %vm460 = vcmask 1046528
        %v461 = vrot.slane %v436, 1
        %v462 = vrot.slane %v437, 1
        %v463 = vsel %vm460, %v461, %v462
        %v464 = vrot.slane %v438, 1
        %v465 = vsel %vm460, %v462, %v464
        %v466 = vrot.slane %v439, 1
        %v467 = vrot.slane %v440, 1
        %v468 = vsel %vm460, %v466, %v467
        %v469 = vrot.slane %v441, 1
        %v470 = vsel %vm460, %v467, %v469
        %v471 = vrot.slane %v442, 1
        %v472 = vrot.slane %v443, 1
        %v473 = vsel %vm460, %v471, %v472
        %v474 = vrot.slane %v444, 1
        %v475 = vsel %vm460, %v472, %v474
        %v476 = vrot.slane %v445, 1
        %v477 = vrot.slane %v446, 1
        %v478 = vsel %vm460, %v476, %v477
        %v479 = vrot.slane %v447, 1
        %v480 = vsel %vm460, %v477, %v479
        %v489 = vadd.f32 %v405, %v463
        %v490 = vadd.f32 %v406, %v465
        %v491 = vadd.f32 %v407, %v468
        %v492 = vadd.f32 %v408, %v470
        %v493 = vadd.f32 %v409, %v473
        %v494 = vadd.f32 %v410, %v475
        %v495 = vadd.f32 %v411, %v478
        %v496 = vadd.f32 %v412, %v480
        %v497 = vlaneseq
        %v498 = vshrl.u32 %v497, 7
        %v499 = vsub.s32 4, %v498
        %v500 = vrot.slane %v235, %v499
        %502 = vbcast.lane.b32.xlu0 %v500, 256
        %v503 = vpop.permute.xlu0 %502
        %v504 = vlaneseq
        %v505 = vshrl.u32 %v504, 7
        %v506 = vsub.s32 0, %v505
        %v507 = vrot.slane %v503, %v506
        %v508 = vlaneseq
        %v509 = vshrl.u32 %v508, 7
        %v510 = vsub.s32 1, %v509
        %v511 = vrot.slane %v503, %v510
        %v512 = vlaneseq
        %v513 = vshrl.u32 %v512, 7
        %v514 = vsub.s32 2, %v513
        %v515 = vrot.slane %v503, %v514
        %v516 = vlaneseq
        %v517 = vshrl.u32 %v516, 7
        %v518 = vsub.s32 3, %v517
        %v519 = vrot.slane %v503, %v518
        %v520 = vmul.f32 %v223, %v507
        %v521 = vmul.f32 %v224, %v507
        %v522 = vmul.f32 %v225, %v507
        %v523 = vmul.f32 %v226, %v511
        %v524 = vmul.f32 %v227, %v511
        %v525 = vmul.f32 %v228, %v511
        %v526 = vmul.f32 %v229, %v515
        %v527 = vmul.f32 %v230, %v515
        %v528 = vmul.f32 %v231, %v515
        %v529 = vmul.f32 %v232, %v519
        %v530 = vmul.f32 %v233, %v519
        %v531 = vmul.f32 %v234, %v519
        %v544 = vrot.slane %v520, 1
        %v545 = vrot.slane %v521, 1
        %v546 = vsel %vm460, %v544, %v545
        %v547 = vrot.slane %v522, 1
        %v548 = vsel %vm460, %v545, %v547
        %v549 = vrot.slane %v523, 1
        %v550 = vrot.slane %v524, 1
        %v551 = vsel %vm460, %v549, %v550
        %v552 = vrot.slane %v525, 1
        %v553 = vsel %vm460, %v550, %v552
        %v554 = vrot.slane %v526, 1
        %v555 = vrot.slane %v527, 1
        %v556 = vsel %vm460, %v554, %v555
        %v557 = vrot.slane %v528, 1
        %v558 = vsel %vm460, %v555, %v557
        %v559 = vrot.slane %v529, 1
        %v560 = vrot.slane %v530, 1
        %v561 = vsel %vm460, %v559, %v560
        %v562 = vrot.slane %v531, 1
        %v563 = vsel %vm460, %v560, %v562
        %564 = vrot.lane.b32.xlu0 %v546, 127
        %v565 = vpop.permute.xlu0 %564
        %566 = vrot.lane.b32.xlu0 %v548, 127
        %v567 = vpop.permute.xlu0 %566
        %568 = vrot.lane.b32.xlu0 %v551, 127
        %v569 = vpop.permute.xlu0 %568
        %570 = vrot.lane.b32.xlu0 %v553, 127
        %v571 = vpop.permute.xlu0 %570
        %572 = vrot.lane.b32.xlu0 %v556, 127
        %v573 = vpop.permute.xlu0 %572
        %574 = vrot.lane.b32.xlu0 %v558, 127
        %v575 = vpop.permute.xlu0 %574
        %576 = vrot.lane.b32.xlu0 %v561, 127
        %v577 = vpop.permute.xlu0 %576
        %578 = vrot.lane.b32.xlu0 %v563, 127
        %v579 = vpop.permute.xlu0 %578
        %v588 = vadd.f32 %v489, %v565
        %v589 = vadd.f32 %v490, %v567
        %v590 = vadd.f32 %v491, %v569
        %v591 = vadd.f32 %v492, %v571
        %v592 = vadd.f32 %v493, %v573
        %v593 = vadd.f32 %v494, %v575
        %v594 = vadd.f32 %v495, %v577
        %v595 = vadd.f32 %v496, %v579
        %v596 = vlaneseq
        %v597 = vshrl.u32 %v596, 7
        %v598 = vsub.s32 5, %v597
        %v599 = vrot.slane %v235, %v598
        %601 = vbcast.lane.b32.xlu0 %v599, 256
        %v602 = vpop.permute.xlu0 %601
        %v603 = vlaneseq
        %v604 = vshrl.u32 %v603, 7
        %v605 = vsub.s32 0, %v604
        %v606 = vrot.slane %v602, %v605
        %v607 = vlaneseq
        %v608 = vshrl.u32 %v607, 7
        %v609 = vsub.s32 1, %v608
        %v610 = vrot.slane %v602, %v609
        %v611 = vlaneseq
        %v612 = vshrl.u32 %v611, 7
        %v613 = vsub.s32 2, %v612
        %v614 = vrot.slane %v602, %v613
        %v615 = vlaneseq
        %v616 = vshrl.u32 %v615, 7
        %v617 = vsub.s32 3, %v616
        %v618 = vrot.slane %v602, %v617
        %v619 = vmul.f32 %v223, %v606
        %v620 = vmul.f32 %v224, %v606
        %v621 = vmul.f32 %v225, %v606
        %v622 = vmul.f32 %v226, %v610
        %v623 = vmul.f32 %v227, %v610
        %v624 = vmul.f32 %v228, %v610
        %v625 = vmul.f32 %v229, %v614
        %v626 = vmul.f32 %v230, %v614
        %v627 = vmul.f32 %v231, %v614
        %v628 = vmul.f32 %v232, %v618
        %v629 = vmul.f32 %v233, %v618
        %v630 = vmul.f32 %v234, %v618
        %v643 = vrot.slane %v619, 1
        %v644 = vrot.slane %v620, 1
        %v645 = vsel %vm460, %v643, %v644
        %v646 = vrot.slane %v621, 1
        %v647 = vsel %vm460, %v644, %v646
        %v648 = vrot.slane %v622, 1
        %v649 = vrot.slane %v623, 1
        %v650 = vsel %vm460, %v648, %v649
        %v651 = vrot.slane %v624, 1
        %v652 = vsel %vm460, %v649, %v651
        %v653 = vrot.slane %v625, 1
        %v654 = vrot.slane %v626, 1
        %v655 = vsel %vm460, %v653, %v654
        %v656 = vrot.slane %v627, 1
        %v657 = vsel %vm460, %v654, %v656
        %v658 = vrot.slane %v628, 1
        %v659 = vrot.slane %v629, 1
        %v660 = vsel %vm460, %v658, %v659
        %v661 = vrot.slane %v630, 1
        %v662 = vsel %vm460, %v659, %v661
        %663 = vrot.lane.b32.xlu0 %v645, 126
        %v664 = vpop.permute.xlu0 %663
        %665 = vrot.lane.b32.xlu0 %v647, 126
        %v666 = vpop.permute.xlu0 %665
        %667 = vrot.lane.b32.xlu0 %v650, 126
        %v668 = vpop.permute.xlu0 %667
        %669 = vrot.lane.b32.xlu0 %v652, 126
        %v670 = vpop.permute.xlu0 %669
        %671 = vrot.lane.b32.xlu0 %v655, 126
        %v672 = vpop.permute.xlu0 %671
        %673 = vrot.lane.b32.xlu0 %v657, 126
        %v674 = vpop.permute.xlu0 %673
        %675 = vrot.lane.b32.xlu0 %v660, 126
        %v676 = vpop.permute.xlu0 %675
        %677 = vrot.lane.b32.xlu0 %v662, 126
        %v678 = vpop.permute.xlu0 %677
        %v687 = vadd.f32 %v588, %v664
        %v688 = vadd.f32 %v589, %v666
        %v689 = vadd.f32 %v590, %v668
        %v690 = vadd.f32 %v591, %v670
        %v691 = vadd.f32 %v592, %v672
        %v692 = vadd.f32 %v593, %v674
        %v693 = vadd.f32 %v594, %v676
        %v694 = vadd.f32 %v595, %v678
        %v695 = vlaneseq
        %v696 = vshrl.u32 %v695, 7
        %v697 = vsub.s32 6, %v696
        %v698 = vrot.slane %v235, %v697
        %700 = vbcast.lane.b32.xlu0 %v698, 256
        %v701 = vpop.permute.xlu0 %700
        %v702 = vlaneseq
        %v703 = vshrl.u32 %v702, 7
        %v704 = vsub.s32 0, %v703
        %v705 = vrot.slane %v701, %v704
        %v706 = vlaneseq
        %v707 = vshrl.u32 %v706, 7
        %v708 = vsub.s32 1, %v707
        %v709 = vrot.slane %v701, %v708
        %v710 = vlaneseq
        %v711 = vshrl.u32 %v710, 7
        %v712 = vsub.s32 2, %v711
        %v713 = vrot.slane %v701, %v712
        %v714 = vlaneseq
        %v715 = vshrl.u32 %v714, 7
        %v716 = vsub.s32 3, %v715
        %v717 = vrot.slane %v701, %v716
        %v718 = vmul.f32 %v223, %v705
        %v719 = vmul.f32 %v224, %v705
        %v720 = vmul.f32 %v225, %v705
        %v721 = vmul.f32 %v226, %v709
        %v722 = vmul.f32 %v227, %v709
        %v723 = vmul.f32 %v228, %v709
        %v724 = vmul.f32 %v229, %v713
        %v725 = vmul.f32 %v230, %v713
        %v726 = vmul.f32 %v231, %v713
        %v727 = vmul.f32 %v232, %v717
        %v728 = vmul.f32 %v233, %v717
        %v729 = vmul.f32 %v234, %v717
        %vm742 = vcmask 1045504
        %v743 = vrot.slane %v718, 2
        %v744 = vrot.slane %v719, 2
        %v745 = vsel %vm742, %v743, %v744
        %v746 = vrot.slane %v720, 2
        %v747 = vsel %vm742, %v744, %v746
        %v748 = vrot.slane %v721, 2
        %v749 = vrot.slane %v722, 2
        %v750 = vsel %vm742, %v748, %v749
        %v751 = vrot.slane %v723, 2
        %v752 = vsel %vm742, %v749, %v751
        %v753 = vrot.slane %v724, 2
        %v754 = vrot.slane %v725, 2
        %v755 = vsel %vm742, %v753, %v754
        %v756 = vrot.slane %v726, 2
        %v757 = vsel %vm742, %v754, %v756
        %v758 = vrot.slane %v727, 2
        %v759 = vrot.slane %v728, 2
        %v760 = vsel %vm742, %v758, %v759
        %v761 = vrot.slane %v729, 2
        %v762 = vsel %vm742, %v759, %v761
        %v771 = vadd.f32 %v687, %v745
        %v772 = vadd.f32 %v688, %v747
        %v773 = vadd.f32 %v689, %v750
        %v774 = vadd.f32 %v690, %v752
        %v775 = vadd.f32 %v691, %v755
        %v776 = vadd.f32 %v692, %v757
        %v777 = vadd.f32 %v693, %v760
        %v778 = vadd.f32 %v694, %v762
        %v779 = vlaneseq
        %v780 = vshrl.u32 %v779, 7
        %v781 = vsub.s32 7, %v780
        %v782 = vrot.slane %v235, %v781
        %784 = vbcast.lane.b32.xlu0 %v782, 256
        %v785 = vpop.permute.xlu0 %784
        %v786 = vlaneseq
        %v787 = vshrl.u32 %v786, 7
        %v788 = vsub.s32 0, %v787
        %v789 = vrot.slane %v785, %v788
        %v790 = vlaneseq
        %v791 = vshrl.u32 %v790, 7
        %v792 = vsub.s32 1, %v791
        %v793 = vrot.slane %v785, %v792
        %v794 = vlaneseq
        %v795 = vshrl.u32 %v794, 7
        %v796 = vsub.s32 2, %v795
        %v797 = vrot.slane %v785, %v796
        %v798 = vlaneseq
        %v799 = vshrl.u32 %v798, 7
        %v800 = vsub.s32 3, %v799
        %v801 = vrot.slane %v785, %v800
        %v802 = vmul.f32 %v223, %v789
        %v803 = vmul.f32 %v224, %v789
        %v804 = vmul.f32 %v225, %v789
        %v805 = vmul.f32 %v226, %v793
        %v806 = vmul.f32 %v227, %v793
        %v807 = vmul.f32 %v228, %v793
        %v808 = vmul.f32 %v229, %v797
        %v809 = vmul.f32 %v230, %v797
        %v810 = vmul.f32 %v231, %v797
        %v811 = vmul.f32 %v232, %v801
        %v812 = vmul.f32 %v233, %v801
        %v813 = vmul.f32 %v234, %v801
        %v826 = vrot.slane %v802, 2
        %v827 = vrot.slane %v803, 2
        %v828 = vsel %vm742, %v826, %v827
        %v829 = vrot.slane %v804, 2
        %v830 = vsel %vm742, %v827, %v829
        %v831 = vrot.slane %v805, 2
        %v832 = vrot.slane %v806, 2
        %v833 = vsel %vm742, %v831, %v832
        %v834 = vrot.slane %v807, 2
        %v835 = vsel %vm742, %v832, %v834
        %v836 = vrot.slane %v808, 2
        %v837 = vrot.slane %v809, 2
        %v838 = vsel %vm742, %v836, %v837
        %v839 = vrot.slane %v810, 2
        %v840 = vsel %vm742, %v837, %v839
        %v841 = vrot.slane %v811, 2
        %v842 = vrot.slane %v812, 2
        %v843 = vsel %vm742, %v841, %v842
        %v844 = vrot.slane %v813, 2
        %v845 = vsel %vm742, %v842, %v844
        %846 = vrot.lane.b32.xlu0 %v828, 127
        %v847 = vpop.permute.xlu0 %846
        %848 = vrot.lane.b32.xlu0 %v830, 127
        %v849 = vpop.permute.xlu0 %848
        %850 = vrot.lane.b32.xlu0 %v833, 127
        %v851 = vpop.permute.xlu0 %850
        %852 = vrot.lane.b32.xlu0 %v835, 127
        %v853 = vpop.permute.xlu0 %852
        %854 = vrot.lane.b32.xlu0 %v838, 127
        %v855 = vpop.permute.xlu0 %854
        %856 = vrot.lane.b32.xlu0 %v840, 127
        %v857 = vpop.permute.xlu0 %856
        %858 = vrot.lane.b32.xlu0 %v843, 127
        %v859 = vpop.permute.xlu0 %858
        %860 = vrot.lane.b32.xlu0 %v845, 127
        %v861 = vpop.permute.xlu0 %860
        %v870 = vadd.f32 %v771, %v847
        %v871 = vadd.f32 %v772, %v849
        %v872 = vadd.f32 %v773, %v851
        %v873 = vadd.f32 %v774, %v853
        %v874 = vadd.f32 %v775, %v855
        %v875 = vadd.f32 %v776, %v857
        %v876 = vadd.f32 %v777, %v859
        %v877 = vadd.f32 %v778, %v861
        %v878 = vlaneseq
        %v879 = vshrl.u32 %v878, 7
        %v880 = vsub.s32 0, %v879
        %v881 = vrot.slane %v236, %v880
        %883 = vbcast.lane.b32.xlu0 %v881, 256
        %v884 = vpop.permute.xlu0 %883
        %v885 = vlaneseq
        %v886 = vshrl.u32 %v885, 7
        %v887 = vsub.s32 0, %v886
        %v888 = vrot.slane %v884, %v887
        %v889 = vlaneseq
        %v890 = vshrl.u32 %v889, 7
        %v891 = vsub.s32 1, %v890
        %v892 = vrot.slane %v884, %v891
        %v893 = vlaneseq
        %v894 = vshrl.u32 %v893, 7
        %v895 = vsub.s32 2, %v894
        %v896 = vrot.slane %v884, %v895
        %v897 = vlaneseq
        %v898 = vshrl.u32 %v897, 7
        %v899 = vsub.s32 3, %v898
        %v900 = vrot.slane %v884, %v899
        %v901 = vmul.f32 %v223, %v888
        %v902 = vmul.f32 %v224, %v888
        %v903 = vmul.f32 %v225, %v888
        %v904 = vmul.f32 %v226, %v892
        %v905 = vmul.f32 %v227, %v892
        %v906 = vmul.f32 %v228, %v892
        %v907 = vmul.f32 %v229, %v896
        %v908 = vmul.f32 %v230, %v896
        %v909 = vmul.f32 %v231, %v896
        %v910 = vmul.f32 %v232, %v900
        %v911 = vmul.f32 %v233, %v900
        %v912 = vmul.f32 %v234, %v900
        %v925 = vrot.slane %v901, 2
        %v926 = vrot.slane %v902, 2
        %v927 = vsel %vm742, %v925, %v926
        %v928 = vrot.slane %v903, 2
        %v929 = vsel %vm742, %v926, %v928
        %v930 = vrot.slane %v904, 2
        %v931 = vrot.slane %v905, 2
        %v932 = vsel %vm742, %v930, %v931
        %v933 = vrot.slane %v906, 2
        %v934 = vsel %vm742, %v931, %v933
        %v935 = vrot.slane %v907, 2
        %v936 = vrot.slane %v908, 2
        %v937 = vsel %vm742, %v935, %v936
        %v938 = vrot.slane %v909, 2
        %v939 = vsel %vm742, %v936, %v938
        %v940 = vrot.slane %v910, 2
        %v941 = vrot.slane %v911, 2
        %v942 = vsel %vm742, %v940, %v941
        %v943 = vrot.slane %v912, 2
        %v944 = vsel %vm742, %v941, %v943
        %945 = vrot.lane.b32.xlu0 %v927, 126
        %v946 = vpop.permute.xlu0 %945
        %947 = vrot.lane.b32.xlu0 %v929, 126
        %v948 = vpop.permute.xlu0 %947
        %949 = vrot.lane.b32.xlu0 %v932, 126
        %v950 = vpop.permute.xlu0 %949
        %951 = vrot.lane.b32.xlu0 %v934, 126
        %v952 = vpop.permute.xlu0 %951
        %953 = vrot.lane.b32.xlu0 %v937, 126
        %v954 = vpop.permute.xlu0 %953
        %955 = vrot.lane.b32.xlu0 %v939, 126
        %v956 = vpop.permute.xlu0 %955
        %957 = vrot.lane.b32.xlu0 %v942, 126
        %v958 = vpop.permute.xlu0 %957
        %959 = vrot.lane.b32.xlu0 %v944, 126
        %v960 = vpop.permute.xlu0 %959
        %v969 = vadd.f32 %v870, %v946
        %v970 = vadd.f32 %v871, %v948
        %v971 = vadd.f32 %v872, %v950
        %v972 = vadd.f32 %v873, %v952
        %v973 = vadd.f32 %v874, %v954
        %v974 = vadd.f32 %v875, %v956
        %v975 = vadd.f32 %v876, %v958
        %v976 = vadd.f32 %v877, %v960
        %v979 = vunpack.c.l.s4 1966171168
        %v980 = vunpack.c.0.s8 %v979
        %v981 = vlaneseq
        %v982 = vshrl.u32 %v981, 7
        %v983 = vsub.s32 %v980, %v982
        %v984 = vrot.slane %v237, %v983
        %v985 = vcombine.high %v984, %v984
        %v987 = vunpack.c.l.s4 1966171168
        %v988 = vunpack.c.0.s8 %v987
        %v989 = vlaneseq
        %v990 = vshrl.u32 %v989, 7
        %v991 = vsub.s32 %v988, %v990
        %v992 = vrot.slane %v984, %v991
        %v994 = vunpack.c.l.s4 1966171168
        %v995 = vunpack.c.0.s8 %v994
        %v996 = vlaneseq
        %v997 = vshrl.u32 %v996, 7
        %v998 = vsub.s32 %v995, %v997
        %v999 = vrot.slane %v985, %v998
        %v1000 = vcombine.high %v992, %v992
        %v1001 = vcombine.high %v999, %v999
        %v1002 = vlaneseq
        %v1003 = vshrl.u32 %v1002, 7
        %v1004 = vsub.s32 0, %v1003
        %v1005 = vrot.slane %v992, %v1004
        %v1006 = vlaneseq
        %v1007 = vshrl.u32 %v1006, 7
        %v1008 = vsub.s32 0, %v1007
        %v1009 = vrot.slane %v999, %v1008
        %v1010 = vlaneseq
        %v1011 = vshrl.u32 %v1010, 7
        %v1012 = vsub.s32 0, %v1011
        %v1013 = vrot.slane %v1000, %v1012
        %v1014 = vlaneseq
        %v1015 = vshrl.u32 %v1014, 7
        %v1016 = vsub.s32 0, %v1015
        %v1017 = vrot.slane %v1001, %v1016
        %1018 = vset.pattern.permute.xlu0 0
        %1019 = vperm.xlu0 %1018, %v1005
        %v1020 = vpop.permute.xlu0 %1019
        %1022 = vset.pattern.permute.xlu0 0
        %1023 = vperm.xlu0 %1022, %v1009
        %v1024 = vpop.permute.xlu0 %1023
        %1026 = vset.pattern.permute.xlu0 0
        %1027 = vperm.xlu0 %1026, %v1013
        %v1028 = vpop.permute.xlu0 %1027
        %1030 = vset.pattern.permute.xlu0 0
        %1031 = vperm.xlu0 %1030, %v1017
        %v1032 = vpop.permute.xlu0 %1031
        %v1034 = vadd.f32 %v969, %v1020
        %v1035 = vadd.f32 %v970, %v1020
        %v1036 = vadd.f32 %v971, %v1024
        %v1037 = vadd.f32 %v972, %v1024
        %v1038 = vadd.f32 %v973, %v1028
        %v1039 = vadd.f32 %v974, %v1028
        %v1040 = vadd.f32 %v975, %v1032
        %v1041 = vadd.f32 %v976, %v1032
        %v1042 = vcombine.low %v1034, %v1038
        %v1043 = vcombine.high %v1034, %v1038
        %v1045 = vunpack.c.l.s4 1983009808
        %v1046 = vunpack.c.0.s8 %v1045
        %v1047 = vlaneseq
        %v1048 = vshrl.u32 %v1047, 7
        %v1049 = vsub.s32 %v1046, %v1048
        %v1050 = vrot.slane %v1042, %v1049
        %v1052 = vunpack.c.l.s4 1983009808
        %v1053 = vunpack.c.0.s8 %v1052
        %v1054 = vlaneseq
        %v1055 = vshrl.u32 %v1054, 7
        %v1056 = vsub.s32 %v1053, %v1055
        %v1057 = vrot.slane %v1043, %v1056
        %v1058 = vcombine.low %v1036, %v1040
        %v1059 = vcombine.high %v1036, %v1040
        %v1061 = vunpack.c.l.s4 1983009808
        %v1062 = vunpack.c.0.s8 %v1061
        %v1063 = vlaneseq
        %v1064 = vshrl.u32 %v1063, 7
        %v1065 = vsub.s32 %v1062, %v1064
        %v1066 = vrot.slane %v1058, %v1065
        %v1068 = vunpack.c.l.s4 1983009808
        %v1069 = vunpack.c.0.s8 %v1068
        %v1070 = vlaneseq
        %v1071 = vshrl.u32 %v1070, 7
        %v1072 = vsub.s32 %v1069, %v1071
        %v1073 = vrot.slane %v1059, %v1072
        %v1074 = vcombine.low %v1050, %v1066
        %v1075 = vcombine.high %v1050, %v1066
        %v1077 = vunpack.c.l.s4 1934713408
        %v1078 = vunpack.c.0.s8 %v1077
        %v1079 = vlaneseq
        %v1080 = vshrl.u32 %v1079, 7
        %v1081 = vsub.s32 %v1078, %v1080
        %v1082 = vrot.slane %v1074, %v1081
        %v1084 = vunpack.c.l.s4 1934713408
        %v1085 = vunpack.c.0.s8 %v1084
        %v1086 = vlaneseq
        %v1087 = vshrl.u32 %v1086, 7
        %v1088 = vsub.s32 %v1085, %v1087
        %v1089 = vrot.slane %v1075, %v1088
        %v1090 = vcombine.low %v1057, %v1073
        %v1091 = vcombine.high %v1057, %v1073
        %v1093 = vunpack.c.l.s4 1934713408
        %v1094 = vunpack.c.0.s8 %v1093
        %v1095 = vlaneseq
        %v1096 = vshrl.u32 %v1095, 7
        %v1097 = vsub.s32 %v1094, %v1096
        %v1098 = vrot.slane %v1090, %v1097
        %v1100 = vunpack.c.l.s4 1934713408
        %v1101 = vunpack.c.0.s8 %v1100
        %v1102 = vlaneseq
        %v1103 = vshrl.u32 %v1102, 7
        %v1104 = vsub.s32 %v1101, %v1103
        %v1105 = vrot.slane %v1091, %v1104
        %v1106 = vcombine.high %v1082, 0.0
        %v1107 = vcombine.high %v1089, 0.0
        %v1108 = vcombine.high %v1098, 0.0
        %v1109 = vcombine.high %v1105, 0.0
        %v1110 = vcombine.low %v1035, %v1039
        %v1111 = vcombine.high %v1035, %v1039
        %v1113 = vunpack.c.l.s4 1983009808
        %v1114 = vunpack.c.0.s8 %v1113
        %v1115 = vlaneseq
        %v1116 = vshrl.u32 %v1115, 7
        %v1117 = vsub.s32 %v1114, %v1116
        %v1118 = vrot.slane %v1110, %v1117
        %v1120 = vunpack.c.l.s4 1983009808
        %v1121 = vunpack.c.0.s8 %v1120
        %v1122 = vlaneseq
        %v1123 = vshrl.u32 %v1122, 7
        %v1124 = vsub.s32 %v1121, %v1123
        %v1125 = vrot.slane %v1111, %v1124
        %v1126 = vcombine.low %v1037, %v1041
        %v1127 = vcombine.high %v1037, %v1041
        %v1129 = vunpack.c.l.s4 1983009808
        %v1130 = vunpack.c.0.s8 %v1129
        %v1131 = vlaneseq
        %v1132 = vshrl.u32 %v1131, 7
        %v1133 = vsub.s32 %v1130, %v1132
        %v1134 = vrot.slane %v1126, %v1133
        %v1136 = vunpack.c.l.s4 1983009808
        %v1137 = vunpack.c.0.s8 %v1136
        %v1138 = vlaneseq
        %v1139 = vshrl.u32 %v1138, 7
        %v1140 = vsub.s32 %v1137, %v1139
        %v1141 = vrot.slane %v1127, %v1140
        %v1142 = vcombine.low %v1118, %v1134
        %v1143 = vcombine.high %v1118, %v1134
        %v1145 = vunpack.c.l.s4 1934713408
        %v1146 = vunpack.c.0.s8 %v1145
        %v1147 = vlaneseq
        %v1148 = vshrl.u32 %v1147, 7
        %v1149 = vsub.s32 %v1146, %v1148
        %v1150 = vrot.slane %v1142, %v1149
        %v1152 = vunpack.c.l.s4 1934713408
        %v1153 = vunpack.c.0.s8 %v1152
        %v1154 = vlaneseq
        %v1155 = vshrl.u32 %v1154, 7
        %v1156 = vsub.s32 %v1153, %v1155
        %v1157 = vrot.slane %v1143, %v1156
        %v1158 = vcombine.low %v1125, %v1141
        %v1159 = vcombine.high %v1125, %v1141
        %v1161 = vunpack.c.l.s4 1934713408
        %v1162 = vunpack.c.0.s8 %v1161
        %v1163 = vlaneseq
        %v1164 = vshrl.u32 %v1163, 7
        %v1165 = vsub.s32 %v1162, %v1164
        %v1166 = vrot.slane %v1158, %v1165
        %v1168 = vunpack.c.l.s4 1934713408
        %v1169 = vunpack.c.0.s8 %v1168
        %v1170 = vlaneseq
        %v1171 = vshrl.u32 %v1170, 7
        %v1172 = vsub.s32 %v1169, %v1171
        %v1173 = vrot.slane %v1159, %v1172
        %v1174 = vcombine.high %v1150, 0.0
        %v1175 = vcombine.high %v1157, 0.0
        %v1176 = vcombine.high %v1166, 0.0
        %v1177 = vcombine.high %v1173, 0.0
        %1179 = vrot.lane.b32.xlu0 %v1106, 16
        %v1180 = vpop.permute.xlu0 %1179
        %1183 = vrot.lane.b32.xlu0 %v1089, 32
        %v1184 = vpop.permute.xlu0 %1183
        %1187 = vrot.lane.b32.xlu0 %v1107, 48
        %v1188 = vpop.permute.xlu0 %1187
        %1191 = vrot.lane.b32.xlu0 %v1098, 64
        %v1192 = vpop.permute.xlu0 %1191
        %1195 = vrot.lane.b32.xlu0 %v1108, 80
        %v1196 = vpop.permute.xlu0 %1195
        %1199 = vrot.lane.b32.xlu0 %v1105, 96
        %v1200 = vpop.permute.xlu0 %1199
        %1203 = vrot.lane.b32.xlu0 %v1109, 112
        %v1204 = vpop.permute.xlu0 %1203
        %1207 = vrot.lane.b32.xlu0 %v1174, 16
        %v1208 = vpop.permute.xlu0 %1207
        %1211 = vrot.lane.b32.xlu0 %v1157, 32
        %v1212 = vpop.permute.xlu0 %1211
        %1215 = vrot.lane.b32.xlu0 %v1175, 48
        %v1216 = vpop.permute.xlu0 %1215
        %1219 = vrot.lane.b32.xlu0 %v1166, 64
        %v1220 = vpop.permute.xlu0 %1219
        %1223 = vrot.lane.b32.xlu0 %v1176, 80
        %v1224 = vpop.permute.xlu0 %1223
        %1227 = vrot.lane.b32.xlu0 %v1173, 96
        %v1228 = vpop.permute.xlu0 %1227
        %1231 = vrot.lane.b32.xlu0 %v1177, 112
        %v1232 = vpop.permute.xlu0 %1231
        %vm1234 = vcmask 130048
        %v1235 = vsel %vm1234, %v1082, %v1180
        %vm1236 = vcmask 261120
        %v1237 = vsel %vm1236, %v1235, %v1184
        %vm1238 = vcmask 392192
        %v1239 = vsel %vm1238, %v1237, %v1188
        %vm1240 = vcmask 523264
        %v1241 = vsel %vm1240, %v1239, %v1192
        %vm1242 = vcmask 654336
        %v1243 = vsel %vm1242, %v1241, %v1196
        %vm1244 = vcmask 785408
        %v1245 = vsel %vm1244, %v1243, %v1200
        %vm1246 = vcmask 916480
        %v1247 = vsel %vm1246, %v1245, %v1204
        %v1248 = vsel %vm1234, %v1150, %v1208
        %v1249 = vsel %vm1236, %v1248, %v1212
        %v1250 = vsel %vm1238, %v1249, %v1216
        %v1251 = vsel %vm1240, %v1250, %v1220
        %v1252 = vsel %vm1242, %v1251, %v1224
        %v1253 = vsel %vm1244, %v1252, %v1228
        %v1254 = vsel %vm1246, %v1253, %v1232
        %1256 = vset.pattern.permute.xlu0 0
        %1257 = vperm.xlu0 %1256, %v239
        %v1258 = vpop.permute.xlu0 %1257
        %vm1260 = vcmask 31744
        %v1262 = vsel %vm1260, %v238, 0
        %vm1264 = vcmask 1043456
        %v1266 = vsel %vm1264, %v1247, 0
        %v1269 = vsel %vm1264, %v1254, 0
        %1271 = vmatprep.subr.mxu0 %v1269
        %1272 = vmatpush1.msra.mxu0 %v1266
        %1273 = vmatprep.subr.mxu0 0.0
        %1274 = vmatpush1.msra.mxu0 0.0
        %1275 = vmatprep.subr.mxu0 0.0
        %1276 = vmatpush1.msra.mxu0 0.0
        %1277 = vmatprep.subr.mxu0 0.0
        %1278 = vmatpush1.msra.mxu0 0.0
        %1279 = vmatprep.subr.mxu0 0.0
        %1280 = vmatpush1.msra.mxu0 0.0
        %1281 = vmatprep.subr.mxu0 0.0
        %1282 = vmatpush1.msra.mxu0 0.0
        %1283 = vmatprep.subr.mxu0 0.0
        %1284 = vmatpush1.msra.mxu0 0.0
        %1285 = vmatprep.subr.mxu0 0.0
        %1286 = vmatpush1.msra.mxu0 0.0
        %1287 = vmatprep.subr.mxu0 0.0
        %1288 = vmatpush1.msra.mxu0 0.0
        %1289 = vmatprep.subr.mxu0 0.0
        %1290 = vmatpush1.msra.mxu0 0.0
        %1291 = vmatprep.subr.mxu0 0.0
        %1292 = vmatpush1.msra.mxu0 0.0
        %1293 = vmatprep.subr.mxu0 0.0
        %1294 = vmatpush1.msra.mxu0 0.0
        %1295 = vmatprep.subr.mxu0 0.0
        %1296 = vmatpush1.msra.mxu0 0.0
        %1297 = vmatprep.subr.mxu0 0.0
        %1298 = vmatpush1.msra.mxu0 0.0
        %1299 = vmatprep.subr.mxu0 0.0
        %1300 = vmatpush1.msra.mxu0 0.0
        %1301 = vmatprep.subr.mxu0 0.0
        %1302 = vmatpush1.msra.mxu0 0.0
        %1303 = vmatprep.subr.mxu0 0.0
        %1304 = vmatpush1.msra.mxu0 0.0
        %1305 = vmatprep.subr.mxu0 0.0
        %1306 = vmatpush1.msra.mxu0 0.0
        %1307 = vmatprep.subr.mxu0 0.0
        %1308 = vmatpush1.msra.mxu0 0.0
        %1309 = vmatprep.subr.mxu0 0.0
        %1310 = vmatpush1.msra.mxu0 0.0
        %1311 = vmatprep.subr.mxu0 0.0
        %1312 = vmatpush1.msra.mxu0 0.0
        %1313 = vmatprep.subr.mxu0 0.0
        %1314 = vmatpush1.msra.mxu0 0.0
        %1315 = vmatprep.subr.mxu0 0.0
        %1316 = vmatpush1.msra.mxu0 0.0
        %1317 = vmatprep.subr.mxu0 0.0
        %1318 = vmatpush1.msra.mxu0 0.0
        %1319 = vmatprep.subr.mxu0 0.0
        %1320 = vmatpush1.msra.mxu0 0.0
        %1321 = vmatprep.subr.mxu0 0.0
        %1322 = vmatpush1.msra.mxu0 0.0
        %1323 = vmatprep.subr.mxu0 0.0
        %1324 = vmatpush1.msra.mxu0 0.0
        %1325 = vmatprep.subr.mxu0 0.0
        %1326 = vmatpush1.msra.mxu0 0.0
        %1327 = vmatprep.subr.mxu0 0.0
        %1328 = vmatpush1.msra.mxu0 0.0
        %1329 = vmatprep.subr.mxu0 0.0
        %1330 = vmatpush1.msra.mxu0 0.0
        %1331 = vmatprep.subr.mxu0 0.0
        %1332 = vmatpush1.msra.mxu0 0.0
        %1333 = vmatprep.subr.mxu0 0.0
        %1334 = vmatpush1.msra.mxu0 0.0
        %1335 = vmatprep.mubr.f32.mxu0 0.0
        %1336 = vmatmul.mubr.f32.gmra.mrb[0].mxu0 %v1262
        %v1337 = vpop.f32.mrb[0].mxu0
        %v1338 = vadd.f32 %v1258, %v1337
        %v1339 = vpop.f32.mrb[0].mxu0
        %v1340 = vadd.f32 %v1258, %v1339
        %1341 = vdwg.mxu0
        %1342 = vst [vmem:[%s217] sm:$0xff] %v1338
        %1343 = vst [vmem:[%s217 + $0x8] sm:$0xff] %v1340
        %s1344 = sand.u32 %s137, 1
        %s1345 = scalar_lea.sflag [#allocation3], %s1344
        %s1346 = sand.u32 %s137, 1
        %s1347 = smul.addr %s1346, 16
        %s1348 = scalar_lea.vmem [#allocation2], %s1347
        // Predicated region
        $region41: #{tpu_custom_call.1} parent=39 // pred_check
          %p1349 = pneg %p147
        $region42: #{tpu_custom_call.1} parent=39 // pred_check_branch
          %1351 = sbr.rel (%p1349) target = $region44
        $region43: #{tpu_custom_call.1} parent=39 // pred_region
          %s1353 = ssub.s32 256, 256
          %1354 = vsyncadd %s1345, %s1353
          %s1355 = smul.addr %s19, 2
          %s1356 = smul.addr %s1355, 128
          %s1357 = scalar_lea.hbm %s5, %s1356
          %s1359 = sshll.u32 %s1348, 4
          %s1360 = int_to_ptr.vmem [resolvable:$true] %s1359
          %1362 = dma.vmem_to_hbm [thread:$0]  %s1360, 256, %s1357, %s1345
        $region44: #{tpu_custom_call.1} parent=39 // pred_fallthru
          _
      $region40: #{tpu_custom_call.1} parent=5 // pred_fallthru
        _
      %p1363 = scmp.le.s32.totalorder 2, %s14
      // Predicated region
      $region45: #{tpu_custom_call.1} parent=5 // pred_check
        %p1364 = pneg %p1363
      $region46: #{tpu_custom_call.1} parent=5 // pred_check_branch
        %1366 = sbr.rel (%p1364) target = $region48
      $region47: #{tpu_custom_call.1} parent=5 // pred_region
        %s1367 = ssub.s32 %s14, 2
        // Predicated region
        $region49: #{tpu_custom_call.1} parent=47 // pred_check
          %p1368 = pneg %p153
        $region50: #{tpu_custom_call.1} parent=47 // pred_check_branch
          %1370 = sbr.rel (%p1368) target = $region52
        $region51: #{tpu_custom_call.1} parent=47 // pred_region
          %s1371 = sand.u32 %s138, 1
          %s1372 = scalar_lea.sflag [#allocation3], %s1371
          %s1373 = sand.u32 %s138, 1
          %s1374 = smul.addr %s1373, 16
          %s1375 = scalar_lea.vmem [#allocation2], %s1374
          %1376 = dma.done %s1372, 256
        $region52: #{tpu_custom_call.1} parent=47 // pred_fallthru
          _
      $region48: #{tpu_custom_call.1} parent=5 // pred_fallthru
        _
    $region6: #{tpu_custom_call.1} parent=1 // loop_footer
      %s18 = sadd.s32 1, %s14
    $region7: #{tpu_custom_call.1} parent=1 // loop_footer_branch
      %13 = sbr.rel target = $region3
    $region8: #{tpu_custom_call.1} parent=1 // loop_exit
      _
    %1377 = vsyncpa [#allocation3], 1
    %s1378 = scalar_lea.sflag [#allocation3], 1
    %1379 = vsyncpa %s1378, 1

</llo_original>
